<compile_context>
chip_gen: v6e
topology: v6e:2x2x1
jax: 0.10.0
libtpu: 0.0.40
codegen_flags: <defaults>
</compile_context>

<pallas_src>
import functools

import jax
import jax.numpy as jnp
from jax.experimental import pallas as pl
from jax.experimental.pallas import tpu as pltpu

_MIB = 1024 * 1024


def _round_up(x: int, m: int) -> int:
    return ((x + m - 1) // m) * m


def _vmem_budget_bytes() -> int:
    """Per-core VMEM budget: capacity minus headroom for Mosaic scratch."""
    try:
        cap = int(pltpu.get_tpu_info().vmem_capacity_bytes)
    except Exception:
        cap = 64 * _MIB  # conservative fallback (v7x per-core size)
    return max(cap - 16 * _MIB, 32 * _MIB)


def _spec(shape, index_map, *, buffered=None):
    """BlockSpec with optional buffer-count override (single-buffer residents)."""
    if buffered is not None:
        try:
            return pl.BlockSpec(shape, index_map, pipeline_mode=pl.Buffered(buffered))
        except TypeError:
            pass  # older jax without pipeline_mode: fall back to default buffering
    return pl.BlockSpec(shape, index_map)


# ---------------------------------------------------------------------------
# Kernels
# ---------------------------------------------------------------------------

def _mlp_kernel_resident(x_ref, w1_ref, b1_ref, w2_ref, b2_ref, o_ref):
    """Both weight matrices fully resident in VMEM; one grid axis over batch."""
    x = x_ref[...].astype(w1_ref.dtype)            # VPU cast, hidden under MXU
    h = jnp.dot(x, w1_ref[...], preferred_element_type=jnp.float32)
    h = jnp.maximum(h + b1_ref[...], 0.0)          # (1, H) bias broadcasts; f32
    o = jnp.dot(h.astype(w2_ref.dtype), w2_ref[...],
                preferred_element_type=jnp.float32)
    o_ref[...] = (o + b2_ref[...]).astype(o_ref.dtype)


def _mlp_kernel_ktiled(x_ref, w1_ref, b1_ref, w2_ref, b2_ref, o_ref, acc_ref):
    """Hidden dim streamed in chunks; f32 VMEM accumulator across the k axis."""
    k = pl.program_id(1)

    @pl.when(k == 0)
    def _():
        acc_ref[...] = jnp.zeros_like(acc_ref)

    x = x_ref[...].astype(w1_ref.dtype)
    h = jnp.dot(x, w1_ref[...], preferred_element_type=jnp.float32)
    h = jnp.maximum(h + b1_ref[...], 0.0)          # ReLU is elementwise over H,
    acc_ref[...] += jnp.dot(h.astype(w2_ref.dtype), w2_ref[...],   # so chunking
                            preferred_element_type=jnp.float32)    # H is exact.

    @pl.when(k == pl.num_programs(1) - 1)
    def _():
        o_ref[...] = (acc_ref[...] + b2_ref[...]).astype(o_ref.dtype)


# ---------------------------------------------------------------------------
# Tile selection
# ---------------------------------------------------------------------------

def _select_tiles(N, d_in_p, d_hid_p, d_out_p, x_itemsize, w_itemsize,
                  out_itemsize, budget, block_n, force_hidden_chunks):
    sub = 16 if w_itemsize == 2 else 8
    if block_n is None:
        block_n = 512 if budget >= 96 * _MIB else 256

    # Batch tile: big to amortize per-step overhead, but keep >= 2 grid steps
    # when N allows it so the "parallel" axis feeds both v7x TensorCores.
    if N > sub:
        bn = min(block_n, _round_up((N + 1) // 2, sub))
    else:
        bn = sub
    bn = _round_up(max(bn, sub), sub)

    if force_hidden_chunks is not None:
        nk = int(force_hidden_chunks)
        if d_hid_p % nk or (d_hid_p // nk) % 128:
            raise ValueError("force_hidden_chunks must split padded hidden dim "
                             "into multiples of 128")
        return bn, d_hid_p // nk, nk

    def fits(bn_, tk_, nk_):
        wbuf = 1 if nk_ == 1 else 2        # single-buffer resident weights
        need = (2 * bn_ * d_in_p * x_itemsize          # x tile (double-buffered)
                + 2 * bn_ * d_out_p * out_itemsize     # out tile (double-buffered)
                + bn_ * d_out_p * 4                    # f32 accumulator scratch
                + bn_ * tk_ * 4                        # live f32 hidden intermediate
                + wbuf * (d_in_p + d_out_p) * tk_ * w_itemsize   # W1 + W2 blocks
                + wbuf * 8 * tk_ * 4 + 8 * d_out_p * 4)          # biases (sublane pad)
        return need <= budget

    # Candidate hidden-chunk widths: divisors of d_hid_p that are multiples of
    # 128 (so prepare-time 128-padding is always sufficient), largest first.
    m = d_hid_p // 128
    tks = sorted({d * 128 for d in range(1, m + 1) if m % d == 0}, reverse=True)

    bn_try = bn
    while True:
        for tk in tks:
            if fits(bn_try, tk, d_hid_p // tk):
                return bn_try, tk, d_hid_p // tk
        if bn_try <= sub:
            # TODO(synk): tile d_in as well for extreme input dims.
            return bn_try, 128, d_hid_p // 128
        bn_try = _round_up(max(sub, bn_try // 2), sub)


# ---------------------------------------------------------------------------
# Forward
# ---------------------------------------------------------------------------

@functools.partial(jax.jit,
                   static_argnames=("d_out", "block_n", "force_hidden_chunks"))
def _forward_padded(x, w1p, b1p, w2p, b2p, *, d_out, block_n=None,
                    force_hidden_chunks=None):
    N, d_in = x.shape
    d_in_p, d_hid_p = w1p.shape
    d_out_p = w2p.shape[1]
    out_dtype = x.dtype

    budget = _vmem_budget_bytes()
    x_itemsize = jnp.dtype(x.dtype).itemsize
    w_itemsize = jnp.dtype(w1p.dtype).itemsize
    out_itemsize = jnp.dtype(out_dtype).itemsize

    bn, tk, nk = _select_tiles(N, d_in_p, d_hid_p, d_out_p, x_itemsize,
                               w_itemsize, out_itemsize, budget, block_n,
                               force_hidden_chunks)
    n_p = _round_up(N, bn)

    # Pad x only when required (rows to a tile multiple, cols to d_in_p).  The
    # compute-dtype cast happens inside the kernel, so no wrapper-side HBM pass.
    pad_rows, pad_cols = n_p - N, d_in_p - d_in
    xp = jnp.pad(x, ((0, pad_rows), (0, pad_cols))) if (pad_rows or pad_cols) else x

    flops = 2 * n_p * d_hid_p * (d_in_p + d_out_p)
    bytes_accessed = (n_p * d_in_p * x_itemsize
                      + (d_in_p * d_hid_p + d_hid_p * d_out_p) * w_itemsize
                      + (d_hid_p + d_out_p) * 4
                      + n_p * d_out_p * out_itemsize)
    cost = pl.CostEstimate(flops=flops, transcendentals=0,
                           bytes_accessed=bytes_accessed)

    if nk == 1:
        # Weights fully resident (single-buffered); one grid axis over batch.
        out = pl.pallas_call(
            _mlp_kernel_resident,
            out_shape=jax.ShapeDtypeStruct((n_p, d_out_p), out_dtype),
            grid_spec=pltpu.PrefetchScalarGridSpec(
                num_scalar_prefetch=0,
                grid=(n_p // bn,),
                in_specs=[
                    pl.BlockSpec((bn, d_in_p), lambda i: (i, 0)),           # x tile
                    _spec((d_in_p, d_hid_p), lambda i: (0, 0), buffered=1),  # W1
                    _spec((1, d_hid_p), lambda i: (0, 0), buffered=1),       # b1 (f32)
                    _spec((d_hid_p, d_out_p), lambda i: (0, 0), buffered=1), # W2
                    _spec((1, d_out_p), lambda i: (0, 0), buffered=1),       # b2 (f32)
                ],
                out_specs=pl.BlockSpec((bn, d_out_p), lambda i: (i, 0)),
            ),
            compiler_params=pltpu.CompilerParams(
                dimension_semantics=("parallel",),
                vmem_limit_bytes=budget),
            cost_estimate=cost,
        )(xp, w1p, b1p, w2p, b2p)
    else:
        # Hidden dim streamed in `nk` chunks of width `tk`; f32 accumulator in
        # VMEM scratch; reduction axis last and marked "arbitrary".
        out = pl.pallas_call(
            _mlp_kernel_ktiled,
            out_shape=jax.ShapeDtypeStruct((n_p, d_out_p), out_dtype),
            grid_spec=pltpu.PrefetchScalarGridSpec(
                num_scalar_prefetch=0,
                grid=(n_p // bn, nk),
                in_specs=[
                    pl.BlockSpec((bn, d_in_p), lambda i, k: (i, 0)),      # x tile
                    pl.BlockSpec((d_in_p, tk), lambda i, k: (0, k)),      # W1 chunk
                    pl.BlockSpec((1, tk), lambda i, k: (0, k)),           # b1 chunk
                    pl.BlockSpec((tk, d_out_p), lambda i, k: (k, 0)),     # W2 chunk
                    _spec((1, d_out_p), lambda i, k: (0, 0), buffered=1), # b2
                ],
                out_specs=pl.BlockSpec((bn, d_out_p), lambda i, k: (i, 0)),
                scratch_shapes=[pltpu.VMEM((bn, d_out_p), jnp.float32)],
            ),
            compiler_params=pltpu.CompilerParams(
                dimension_semantics=("parallel", "arbitrary"),
                vmem_limit_bytes=budget),
            cost_estimate=cost,
        )(xp, w1p, b1p, w2p, b2p)

    return out[:N, :d_out]


# ---------------------------------------------------------------------------
# Public API
# ---------------------------------------------------------------------------

def prepare_classifier_head_params(w1, b1, w2, b2, compute_dtype=jnp.bfloat16):
    """One-time pad (feature dims to multiples of 128) + cast of the weights.

    Zero padding keeps the math identical: padded x cols x padded W1 rows
    contribute 0, padded hidden cols stay 0 through ReLU(0+0)=0, and padded W2
    rows contribute 0.  Biases are kept in f32 for the epilogue.
    """
    d_in, d_hid = w1.shape
    d_out = w2.shape[1]
    cdt = w1.dtype if compute_dtype is None else compute_dtype
    d_in_p, d_hid_p, d_out_p = (_round_up(d, 128) for d in (d_in, d_hid, d_out))
    w1p = jnp.pad(w1, ((0, d_in_p - d_in), (0, d_hid_p - d_hid))).astype(cdt)
    w2p = jnp.pad(w2, ((0, d_hid_p - d_hid), (0, d_out_p - d_out))).astype(cdt)
    b1p = jnp.pad(jnp.reshape(b1, (1, -1)).astype(jnp.float32),
                  ((0, 0), (0, d_hid_p - d_hid)))
    b2p = jnp.pad(jnp.reshape(b2, (1, -1)).astype(jnp.float32),
                  ((0, 0), (0, d_out_p - d_out)))
    return {"w1": w1p, "b1": b1p, "w2": w2p, "b2": b2p, "d_out": d_out}


def apply_classifier_head(params, x, *, block_n=None, force_hidden_chunks=None):
    """Forward pass with pre-prepared (padded/cast) parameters."""
    return _forward_padded(x, params["w1"], params["b1"], params["w2"],
                           params["b2"], d_out=params["d_out"],
                           block_n=block_n,
                           force_hidden_chunks=force_hidden_chunks)


def classifier_head_forward(x, w1, b1, w2, b2, *, compute_dtype=jnp.bfloat16,
                            block_n=None):
    """Convenience one-shot path (prepares weights on every call).

    NOTE: bfloat16 compute (the default) quantizes weights/activations vs. the
    PyTorch f32 reference; accumulation is f32.  Pass compute_dtype=jnp.float32
    for a tight match.  For repeated inference, call
    prepare_classifier_head_params once and apply_classifier_head per batch.
    """
    params = prepare_classifier_head_params(w1, b1, w2, b2,
                                            compute_dtype=compute_dtype)
    return apply_classifier_head(params, x, block_n=block_n)


# ---------------------------------------------------------------------------
# Reference / init / demo
# ---------------------------------------------------------------------------

def init_classifier_head_params(key, input_dim, output_dim, hidden_dim=None,
                                dtype=jnp.float32):
    """Mimics nn.Linear's uniform(-1/sqrt(fan_in), 1/sqrt(fan_in)) init."""
    if hidden_dim is None:
        hidden_dim = input_dim
    k1, k2, k3, k4 = jax.random.split(key, 4)
    bound1 = 1.0 / jnp.sqrt(jnp.asarray(input_dim, dtype))
    bound2 = 1.0 / jnp.sqrt(jnp.asarray(hidden_dim, dtype))
    w1 = jax.random.uniform(k1, (input_dim, hidden_dim), dtype, -bound1, bound1)
    b1 = jax.random.uniform(k2, (1, hidden_dim), dtype, -bound1, bound1)
    w2 = jax.random.uniform(k3, (hidden_dim, output_dim), dtype, -bound2, bound2)
    b2 = jax.random.uniform(k4, (1, output_dim), dtype, -bound2, bound2)
    return w1, b1, w2, b2


def reference_forward(x, w1, b1, w2, b2):
    # Pure-JAX f32 reference matching the PyTorch module (dropout p=0 -> identity).
    h = jnp.maximum(x @ w1 + b1, 0.0)
    return h @ w2 + b2


if __name__ == "__main__":
    key = jax.random.PRNGKey(0)
    kx, kp, kp2 = jax.random.split(key, 3)

    # Small shapes consistent with the module defaults (hidden_dim = input_dim).
    N, input_dim, hidden_dim, output_dim = 16, 32, 32, 8
    x = jax.random.normal(kx, (N, input_dim), jnp.float32)
    w1, b1, w2, b2 = init_classifier_head_params(kp, input_dim, output_dim,
                                                 hidden_dim)
    ref = reference_forward(x, w1, b1, w2, b2)

    # Production path: prepare (pad + cast) weights ONCE, then run the bf16-MXU
    # kernel (f32 accumulation) with weights resident & single-buffered.
    params_bf16 = prepare_classifier_head_params(w1, b1, w2, b2,
                                                 compute_dtype=jnp.bfloat16)
    out = jax.block_until_ready(apply_classifier_head(params_bf16, x))
    assert out.shape == (N, output_dim)
    assert jnp.allclose(out, ref, atol=5e-2, rtol=5e-2), "bf16 path mismatch"

    # f32 compute path: tight match to the PyTorch f32 reference.
    params_f32 = prepare_classifier_head_params(w1, b1, w2, b2,
                                                compute_dtype=jnp.float32)
    out_f32 = jax.block_until_ready(apply_classifier_head(params_f32, x))
    assert jnp.allclose(out_f32, ref, atol=1e-5, rtol=1e-5), "f32 path mismatch"

    # Exercise the hidden-dim-chunked (k-tiled accumulator) path at small scale.
    hd2 = 256
    w1b, b1b, w2b, b2b = init_classifier_head_params(kp2, input_dim, output_dim,
                                                     hd2)
    ref2 = reference_forward(x, w1b, b1b, w2b, b2b)
    params2 = prepare_classifier_head_params(w1b, b1b, w2b, b2b,
                                             compute_dtype=jnp.float32)
    out2 = jax.block_until_ready(
        apply_classifier_head(params2, x, force_hidden_chunks=2))
    assert out2.shape == (N, output_dim)
    assert jnp.allclose(out2, ref2, atol=1e-5, rtol=1e-5), "k-tiled path mismatch"

    print("KERNEL_OK")
</pallas_src>

<mosaic_0001>
module attributes {stable_mosaic.version = 11 : i64} {
  func.func @_mlp_kernel_resident(%arg0: i32, %arg1: memref<16x128xf32, #tpu.memory_space<vmem>>, %arg2: memref<128x128xbf16, #tpu.memory_space<vmem>>, %arg3: memref<1x128xf32, #tpu.memory_space<vmem>>, %arg4: memref<128x128xbf16, #tpu.memory_space<vmem>>, %arg5: memref<1x128xf32, #tpu.memory_space<vmem>>, %arg6: memref<16x128xf32, #tpu.memory_space<vmem>>) attributes {dimension_semantics = [#tpu.dimension_semantics<parallel>], iteration_bounds = array<i64: 1>, scalar_prefetch = 0 : i64, scratch_operands = 0 : i64, tpu.core_type = #tpu.core_type<tc>, window_params = [{transform_indices = @transform_0, window_bounds = array<i64: 16, 128>}, {pipeline_mode = #tpu.pipeline_mode<synchronous>, transform_indices = @transform_1, window_bounds = array<i64: 128, 128>}, {pipeline_mode = #tpu.pipeline_mode<synchronous>, transform_indices = @transform_2, window_bounds = array<i64: 1, 128>}, {pipeline_mode = #tpu.pipeline_mode<synchronous>, transform_indices = @transform_3, window_bounds = array<i64: 128, 128>}, {pipeline_mode = #tpu.pipeline_mode<synchronous>, transform_indices = @transform_4, window_bounds = array<i64: 1, 128>}, {transform_indices = @transform_5, window_bounds = array<i64: 16, 128>}]} {
    %c0 = arith.constant 0 : index
    %c0_0 = arith.constant 0 : index
    %0 = vector.load %arg1[%c0, %c0_0] : memref<16x128xf32, #tpu.memory_space<vmem>>, vector<16x128xf32>
    %1 = arith.truncf %0 : vector<16x128xf32> to vector<16x128xbf16>
    %c0_1 = arith.constant 0 : index
    %c0_2 = arith.constant 0 : index
    %2 = vector.load %arg2[%c0_1, %c0_2] : memref<128x128xbf16, #tpu.memory_space<vmem>>, vector<128x128xbf16>
    %cst = arith.constant dense<0.000000e+00> : vector<16x128xf32>
    %3 = tpu.matmul %1, %2, %cst {dimension_numbers = #tpu.dot_dimension_numbers<[1], [0], [0], [1], [0, 0, 1, 1], [], []>} : vector<16x128xbf16>, vector<128x128xbf16>, vector<16x128xf32> -> vector<16x128xf32>
    %c0_3 = arith.constant 0 : index
    %c0_4 = arith.constant 0 : index
    %4 = vector.load %arg3[%c0_3, %c0_4] : memref<1x128xf32, #tpu.memory_space<vmem>>, vector<1x128xf32>
    %5 = vector.broadcast %4 : vector<1x128xf32> to vector<16x128xf32>
    %6 = arith.addf %3, %5 : vector<16x128xf32>
    %cst_5 = arith.constant 0.000000e+00 : f32
    %7 = vector.broadcast %cst_5 : f32 to vector<16x128xf32>
    %8 = arith.maximumf %6, %7 : vector<16x128xf32>
    %9 = arith.truncf %8 : vector<16x128xf32> to vector<16x128xbf16>
    %c0_6 = arith.constant 0 : index
    %c0_7 = arith.constant 0 : index
    %10 = vector.load %arg4[%c0_6, %c0_7] : memref<128x128xbf16, #tpu.memory_space<vmem>>, vector<128x128xbf16>
    %cst_8 = arith.constant dense<0.000000e+00> : vector<16x128xf32>
    %11 = tpu.matmul %9, %10, %cst_8 {dimension_numbers = #tpu.dot_dimension_numbers<[1], [0], [0], [1], [0, 0, 1, 1], [], []>} : vector<16x128xbf16>, vector<128x128xbf16>, vector<16x128xf32> -> vector<16x128xf32>
    %c0_9 = arith.constant 0 : index
    %c0_10 = arith.constant 0 : index
    %12 = vector.load %arg5[%c0_9, %c0_10] : memref<1x128xf32, #tpu.memory_space<vmem>>, vector<1x128xf32>
    %13 = vector.broadcast %12 : vector<1x128xf32> to vector<16x128xf32>
    %14 = arith.addf %11, %13 : vector<16x128xf32>
    %c0_11 = arith.constant 0 : index
    %c0_12 = arith.constant 0 : index
    %15 = vector.load %arg6[%c0_11, %c0_12] : memref<16x128xf32, #tpu.memory_space<vmem>>, vector<16x128xf32>
    tpu.vector_store %arg6[%c0_11, %c0_12], %14 {strides = array<i32>} : memref<16x128xf32, #tpu.memory_space<vmem>>, vector<16x128xf32>,
    return
  }
  func.func @transform_0(%arg0: i32) -> (i32, i32) {
    %c0_i32 = arith.constant 0 : i32
    %c0_i32_0 = arith.constant 0 : i32
    return %arg0, %c0_i32 : i32, i32
  }
  func.func @transform_1(%arg0: i32) -> (i32, i32) {
    %c0_i32 = arith.constant 0 : i32
    %c0_i32_0 = arith.constant 0 : i32
    %c0_i32_1 = arith.constant 0 : i32
    return %c0_i32, %c0_i32_0 : i32, i32
  }
  func.func @transform_2(%arg0: i32) -> (i32, i32) {
    %c0_i32 = arith.constant 0 : i32
    %c0_i32_0 = arith.constant 0 : i32
    %c0_i32_1 = arith.constant 0 : i32
    return %c0_i32, %c0_i32_0 : i32, i32
  }
  func.func @transform_3(%arg0: i32) -> (i32, i32) {
    %c0_i32 = arith.constant 0 : i32
    %c0_i32_0 = arith.constant 0 : i32
    %c0_i32_1 = arith.constant 0 : i32
    return %c0_i32, %c0_i32_0 : i32, i32
  }
  func.func @transform_4(%arg0: i32) -> (i32, i32) {
    %c0_i32 = arith.constant 0 : i32
    %c0_i32_0 = arith.constant 0 : i32
    %c0_i32_1 = arith.constant 0 : i32
    return %c0_i32, %c0_i32_0 : i32, i32
  }
  func.func @transform_5(%arg0: i32) -> (i32, i32) {
    %c0_i32 = arith.constant 0 : i32
    %c0_i32_0 = arith.constant 0 : i32
    return %arg0, %c0_i32 : i32, i32
  }
}

</mosaic_0001>

<llo_original>
// kernel: _forward_padded.1
$region0: #{_forward_padded.1}
  #allocation0 [shape = 'u32[]', space=smem, size = 0x4, offset = 0x4, fixed_abs, tag = 'smem constant byte address 0x4 - core index']
  #allocation1 [shape = 'u32[144,128]{1,0:T(1,128)}', space=vmem, size = 0x12000, scoped, tag = 'internal scratch']
  %s0 = inlined_call_operand.vmem [shape: f32[16,128], index: 0, kind: input, shape index: {}]
  %s1 = inlined_call_operand.hbm [shape: bf16[128,128], index: 1, kind: input, shape index: {}]
  %s2 = inlined_call_operand.vmem [shape: f32[1,128], index: 2, kind: input, shape index: {}]
  %s3 = inlined_call_operand.hbm [shape: bf16[128,128], index: 3, kind: input, shape index: {}]
  %s4 = inlined_call_operand.vmem [shape: f32[1,128], index: 4, kind: input, shape index: {}]
  %s5 = inlined_call_operand.vmem [shape: f32[16,128], index: 5, kind: output, shape index: {}]
  %s6 = sld [smem:[#allocation0]]
  $region38: #{_forward_padded.1} parent=0
    _
  %s8 = ssub.s32 1, %s6
  %s9 = scalar_select 0, %s8, %s6
  $region1: #{_forward_padded.1} parent=0
    #allocation2 [shape = 'u8[32768]{0}', space=vmem, size = 0x8000, scoped, tag = 'input window, operand 1, single buffered']
    #allocation3 [shape = 's32[1]{0}', space=sflag, size = 0x4, scoped, tag = 'scoped memory for _forward_padded.1']
    #allocation4 [shape = 'u8[32768]{0}', space=vmem, size = 0x8000, scoped, tag = 'input window, operand 3, single buffered']
    #allocation5 [shape = 's32[1]{0}', space=sflag, size = 0x4, scoped, tag = 'scoped memory for _forward_padded.1']
    %10 = vsyncpa [#allocation3], 0
    %11 = vsyncpa [#allocation5], 0
    // Predicated region
    $region2: #{_forward_padded.1} parent=1 // pred_check
      _
    $region3: #{_forward_padded.1} parent=1 // pred_check_branch
      %13 = sbr.rel (0) target = $region5
    $region4: #{_forward_padded.1} parent=1 // pred_region
      _
    $region5: #{_forward_padded.1} parent=1 // pred_fallthru
      _
    // Predicated region
    $region6: #{_forward_padded.1} parent=1 // pred_check
      _
    $region7: #{_forward_padded.1} parent=1 // pred_check_branch
      %15 = sbr.rel (0) target = $region9
    $region8: #{_forward_padded.1} parent=1 // pred_region
      %s17 = ssub.s32 1024, 1024
      %18 = vsyncadd [#allocation3], %s17
      %s19 = sshll.u32 [#allocation2], 4
      %s20 = int_to_ptr.vmem [resolvable:$true] %s19
      %25 = dma.hbm_to_vmem [thread:$0]  %s1, 1024, %s20, [#allocation3], 64, 64, 4
    $region9: #{_forward_padded.1} parent=1 // pred_fallthru
      _
    // Predicated region
    $region10: #{_forward_padded.1} parent=1 // pred_check
      _
    $region11: #{_forward_padded.1} parent=1 // pred_check_branch
      %27 = sbr.rel (0) target = $region13
    $region12: #{_forward_padded.1} parent=1 // pred_region
      _
    $region13: #{_forward_padded.1} parent=1 // pred_fallthru
      _
    // Predicated region
    $region14: #{_forward_padded.1} parent=1 // pred_check
      _
    $region15: #{_forward_padded.1} parent=1 // pred_check_branch
      %29 = sbr.rel (0) target = $region17
    $region16: #{_forward_padded.1} parent=1 // pred_region
      %s31 = ssub.s32 1024, 1024
      %32 = vsyncadd [#allocation5], %s31
      %s33 = sshll.u32 [#allocation4], 4
      %s34 = int_to_ptr.vmem [resolvable:$true] %s33
      %39 = dma.hbm_to_vmem [thread:$0]  %s3, 1024, %s34, [#allocation5], 64, 64, 4
    $region17: #{_forward_padded.1} parent=1 // pred_fallthru
      _
    // Predicated region
    $region18: #{_forward_padded.1} parent=1 // pred_check
      _
    $region19: #{_forward_padded.1} parent=1 // pred_check_branch
      %41 = sbr.rel (0) target = $region21
    $region20: #{_forward_padded.1} parent=1 // pred_region
      _
    $region21: #{_forward_padded.1} parent=1 // pred_fallthru
      _
    // Predicated region
    $region22: #{_forward_padded.1} parent=1 // pred_check
      _
    $region23: #{_forward_padded.1} parent=1 // pred_check_branch
      %43 = sbr.rel (0) target = $region25
    $region24: #{_forward_padded.1} parent=1 // pred_region
      %44 = dma.done [#allocation3], 1024
    $region25: #{_forward_padded.1} parent=1 // pred_fallthru
      _
    // Predicated region
    $region26: #{_forward_padded.1} parent=1 // pred_check
      _
    $region27: #{_forward_padded.1} parent=1 // pred_check_branch
      %46 = sbr.rel (0) target = $region29
    $region28: #{_forward_padded.1} parent=1 // pred_region
      %47 = dma.done [#allocation5], 1024
    $region29: #{_forward_padded.1} parent=1 // pred_fallthru
      _
    %v49 = vld [vmem:[%s0] sm:$0xff]
    %v50 = vld [vmem:[%s0 + $0x8] sm:$0xff]
    %v51 = vpack.c.bf16 %v50, %v49
    %v52 = vld [vmem:[#allocation2] sm:$0xf]
    %v53 = vld [vmem:[#allocation2 + $0x4] sm:$0xf]
    %v54 = vld [vmem:[#allocation2 + $0x8] sm:$0xf]
    %v55 = vld [vmem:[#allocation2 + $0xc] sm:$0xf]
    %v56 = vld [vmem:[#allocation2 + $0x10] sm:$0xf]
    %v57 = vld [vmem:[#allocation2 + $0x14] sm:$0xf]
    %v58 = vld [vmem:[#allocation2 + $0x18] sm:$0xf]
    %v59 = vld [vmem:[#allocation2 + $0x1c] sm:$0xf]
    %v60 = vld [vmem:[#allocation2 + $0x20] sm:$0xf]
    %v61 = vld [vmem:[#allocation2 + $0x24] sm:$0xf]
    %v62 = vld [vmem:[#allocation2 + $0x28] sm:$0xf]
    %v63 = vld [vmem:[#allocation2 + $0x2c] sm:$0xf]
    %v64 = vld [vmem:[#allocation2 + $0x30] sm:$0xf]
    %v65 = vld [vmem:[#allocation2 + $0x34] sm:$0xf]
    %v66 = vld [vmem:[#allocation2 + $0x38] sm:$0xf]
    %v67 = vld [vmem:[#allocation2 + $0x3c] sm:$0xf]
    %v68 = vld [vmem:[%s2] sm:$0x1]
    %v70 = vlaneseq
    %v71 = vshrl.u32 %v70, 7
    %v72 = vsub.s32 0, %v71
    %v73 = vrot.slane %v68, %v72
    %v91 = vunpack.c.l.b16 %v52
    %v92 = vunpack.c.l.b16 %v53
    %v93 = vunpack.c.l.b16 %v54
    %v94 = vunpack.c.l.b16 %v55
    %v95 = vunpack.c.l.b16 %v56
    %v96 = vunpack.c.l.b16 %v57
    %v97 = vunpack.c.l.b16 %v58
    %v98 = vunpack.c.l.b16 %v59
    %v99 = vunpack.c.l.b16 %v60
    %v100 = vunpack.c.l.b16 %v61
    %v101 = vunpack.c.l.b16 %v62
    %v102 = vunpack.c.l.b16 %v63
    %v103 = vunpack.c.l.b16 %v64
    %v104 = vunpack.c.l.b16 %v65
    %v105 = vunpack.c.l.b16 %v66
    %v106 = vunpack.c.l.b16 %v67
    %v107 = vpack.c.b16 %v92, %v91
    %v108 = vpack.c.b16 %v94, %v93
    %v109 = vpack.c.b16 %v96, %v95
    %v110 = vpack.c.b16 %v98, %v97
    %v111 = vpack.c.b16 %v100, %v99
    %v112 = vpack.c.b16 %v102, %v101
    %v113 = vpack.c.b16 %v104, %v103
    %v114 = vpack.c.b16 %v106, %v105
    %123 = vmatprep.subr.bf16.mxu0 0
    %124 = vmatpush1.bf16.msra.mxu0 %v114
    %125 = vmatprep.subr.bf16.mxu0 0
    %126 = vmatpush1.bf16.msra.mxu0 %v113
    %127 = vmatprep.subr.bf16.mxu0 0
    %128 = vmatpush1.bf16.msra.mxu0 %v112
    %129 = vmatprep.subr.bf16.mxu0 0
    %130 = vmatpush1.bf16.msra.mxu0 %v111
    %131 = vmatprep.subr.bf16.mxu0 0
    %132 = vmatpush1.bf16.msra.mxu0 %v110
    %133 = vmatprep.subr.bf16.mxu0 0
    %134 = vmatpush1.bf16.msra.mxu0 %v109
    %135 = vmatprep.subr.bf16.mxu0 0
    %136 = vmatpush1.bf16.msra.mxu0 %v108
    %137 = vmatprep.subr.bf16.mxu0 0
    %138 = vmatpush1.bf16.msra.mxu0 %v107
    %139 = vmatprep.subr.bf16.mxu0 0
    %140 = vmatpush2.bf16.msra.mxu0 0
    %141 = vmatprep.subr.bf16.mxu0 0
    %142 = vmatpush2.bf16.msra.mxu0 0
    %143 = vmatprep.subr.bf16.mxu0 0
    %144 = vmatpush2.bf16.msra.mxu0 0
    %145 = vmatprep.subr.bf16.mxu0 0
    %146 = vmatpush2.bf16.msra.mxu0 0
    %147 = vmatprep.subr.bf16.mxu0 0
    %148 = vmatpush2.bf16.msra.mxu0 0
    %149 = vmatprep.subr.bf16.mxu0 0
    %150 = vmatpush2.bf16.msra.mxu0 0
    %151 = vmatprep.subr.bf16.mxu0 0
    %152 = vmatpush2.bf16.msra.mxu0 0
    %153 = vmatprep.subr.bf16.mxu0 0
    %154 = vmatpush2.bf16.msra.mxu0 0
    %155 = vmatprep.mubr.bf16.mxu0 0
    %156 = vmatmul.mubr.bf16.gmra.mxu0 %v51
    %v157 = vpop.f32.mrf.mxu0
    %v158 = vadd.f32 %v73, %v157
    %v159 = vpop.f32.mrf.mxu0
    %v160 = vpop.f32.mrf.mxu0
    %v161 = vadd.f32 %v73, %v160
    %v162 = vpop.f32.mrf.mxu0
    %163 = vdwg.mxu0
    %v164 = vmax.f32 %v158, 0.0
    %v165 = vmax.f32 %v161, 0.0
    %v166 = vpack.c.bf16 %v165, %v164
    %v167 = vld [vmem:[#allocation4] sm:$0xf]
    %v168 = vld [vmem:[#allocation4 + $0x4] sm:$0xf]
    %v169 = vld [vmem:[#allocation4 + $0x8] sm:$0xf]
    %v170 = vld [vmem:[#allocation4 + $0xc] sm:$0xf]
    %v171 = vld [vmem:[#allocation4 + $0x10] sm:$0xf]
    %v172 = vld [vmem:[#allocation4 + $0x14] sm:$0xf]
    %v173 = vld [vmem:[#allocation4 + $0x18] sm:$0xf]
    %v174 = vld [vmem:[#allocation4 + $0x1c] sm:$0xf]
    %v175 = vld [vmem:[#allocation4 + $0x20] sm:$0xf]
    %v176 = vld [vmem:[#allocation4 + $0x24] sm:$0xf]
    %v177 = vld [vmem:[#allocation4 + $0x28] sm:$0xf]
    %v178 = vld [vmem:[#allocation4 + $0x2c] sm:$0xf]
    %v179 = vld [vmem:[#allocation4 + $0x30] sm:$0xf]
    %v180 = vld [vmem:[#allocation4 + $0x34] sm:$0xf]
    %v181 = vld [vmem:[#allocation4 + $0x38] sm:$0xf]
    %v182 = vld [vmem:[#allocation4 + $0x3c] sm:$0xf]
    %v183 = vld [vmem:[%s4] sm:$0x1]
    %v185 = vlaneseq
    %v186 = vshrl.u32 %v185, 7
    %v187 = vsub.s32 0, %v186
    %v188 = vrot.slane %v183, %v187
    %v206 = vunpack.c.l.b16 %v167
    %v207 = vunpack.c.l.b16 %v168
    %v208 = vunpack.c.l.b16 %v169
    %v209 = vunpack.c.l.b16 %v170
    %v210 = vunpack.c.l.b16 %v171
    %v211 = vunpack.c.l.b16 %v172
    %v212 = vunpack.c.l.b16 %v173
    %v213 = vunpack.c.l.b16 %v174
    %v214 = vunpack.c.l.b16 %v175
    %v215 = vunpack.c.l.b16 %v176
    %v216 = vunpack.c.l.b16 %v177
    %v217 = vunpack.c.l.b16 %v178
    %v218 = vunpack.c.l.b16 %v179
    %v219 = vunpack.c.l.b16 %v180
    %v220 = vunpack.c.l.b16 %v181
    %v221 = vunpack.c.l.b16 %v182
    %v222 = vpack.c.b16 %v207, %v206
    %v223 = vpack.c.b16 %v209, %v208
    %v224 = vpack.c.b16 %v211, %v210
    %v225 = vpack.c.b16 %v213, %v212
    %v226 = vpack.c.b16 %v215, %v214
    %v227 = vpack.c.b16 %v217, %v216
    %v228 = vpack.c.b16 %v219, %v218
    %v229 = vpack.c.b16 %v221, %v220
    %238 = vmatprep.subr.bf16.mxu0 0
    %239 = vmatpush1.bf16.msra.mxu0 %v229
    %240 = vmatprep.subr.bf16.mxu0 0
    %241 = vmatpush1.bf16.msra.mxu0 %v228
    %242 = vmatprep.subr.bf16.mxu0 0
    %243 = vmatpush1.bf16.msra.mxu0 %v227
    %244 = vmatprep.subr.bf16.mxu0 0
    %245 = vmatpush1.bf16.msra.mxu0 %v226
    %246 = vmatprep.subr.bf16.mxu0 0
    %247 = vmatpush1.bf16.msra.mxu0 %v225
    %248 = vmatprep.subr.bf16.mxu0 0
    %249 = vmatpush1.bf16.msra.mxu0 %v224
    %250 = vmatprep.subr.bf16.mxu0 0
    %251 = vmatpush1.bf16.msra.mxu0 %v223
    %252 = vmatprep.subr.bf16.mxu0 0
    %253 = vmatpush1.bf16.msra.mxu0 %v222
    %254 = vmatprep.subr.bf16.mxu0 0
    %255 = vmatpush2.bf16.msra.mxu0 0
    %256 = vmatprep.subr.bf16.mxu0 0
    %257 = vmatpush2.bf16.msra.mxu0 0
    %258 = vmatprep.subr.bf16.mxu0 0
    %259 = vmatpush2.bf16.msra.mxu0 0
    %260 = vmatprep.subr.bf16.mxu0 0
    %261 = vmatpush2.bf16.msra.mxu0 0
    %262 = vmatprep.subr.bf16.mxu0 0
    %263 = vmatpush2.bf16.msra.mxu0 0
    %264 = vmatprep.subr.bf16.mxu0 0
    %265 = vmatpush2.bf16.msra.mxu0 0
    %266 = vmatprep.subr.bf16.mxu0 0
    %267 = vmatpush2.bf16.msra.mxu0 0
    %268 = vmatprep.subr.bf16.mxu0 0
    %269 = vmatpush2.bf16.msra.mxu0 0
    %270 = vmatprep.mubr.bf16.mxu0 0
    %271 = vmatmul.mubr.bf16.gmra.mxu0 %v166
    %v272 = vpop.f32.mrf.mxu0
    %v273 = vadd.f32 %v188, %v272
    %v274 = vpop.f32.mrf.mxu0
    %v275 = vpop.f32.mrf.mxu0
    %v276 = vadd.f32 %v188, %v275
    %v277 = vpop.f32.mrf.mxu0
    %278 = vdwg.mxu0
    %279 = vst [vmem:[%s5] sm:$0xff] %v273
    %280 = vst [vmem:[%s5 + $0x8] sm:$0xff] %v276
    // Predicated region
    $region30: #{_forward_padded.1} parent=1 // pred_check
      _
    $region31: #{_forward_padded.1} parent=1 // pred_check_branch
      %282 = sbr.rel (0) target = $region33
    $region32: #{_forward_padded.1} parent=1 // pred_region
      _
    $region33: #{_forward_padded.1} parent=1 // pred_fallthru
      _
    // Predicated region
    $region34: #{_forward_padded.1} parent=1 // pred_check
      _
    $region35: #{_forward_padded.1} parent=1 // pred_check_branch
      %284 = sbr.rel (0) target = $region37
    $region36: #{_forward_padded.1} parent=1 // pred_region
      _
    $region37: #{_forward_padded.1} parent=1 // pred_fallthru
      _
    %285 = vsyncpa [#allocation3], 1
    %286 = vsyncpa [#allocation5], 1

</llo_original>
